<compile_context>
chip_gen: v7x
topology: tpu7x:2x2x1
jax: 0.10.0
libtpu: 0.0.40
codegen_flags: <defaults>
</compile_context>

<pallas_src>
import jax
import jax.numpy as jnp
from jax.experimental import pallas as pl
from jax.experimental.pallas import tpu as pltpu


def _round_up(x, m):
    return ((x + m - 1) // m) * m


def _cdiv(a, b):
    return -(-a // b)


# ---------------------------------------------------------------------------
# Fused kernel builder (num_hidden hidden layers + output head)
# ---------------------------------------------------------------------------
def _make_fused_mlp_kernel(num_hidden):
    n_inputs = 1 + 2 * (num_hidden + 1)   # x + (w, b) for every layer

    def kernel(*refs):
        in_refs = refs[:n_inputs]
        out_refs = refs[n_inputs:]          # fc1..fcH pre-activations + final out

        x_ref, w1_ref, b1_ref = in_refs[0], in_refs[1], in_refs[2]
        fc1_ref = out_refs[0]               # f32, resident across the K reduction
        k = pl.program_id(0)

        @pl.when(k == 0)
        def _init():
            fc1_ref[...] = jnp.zeros_like(fc1_ref)

        # K-tiled accumulation for the (potentially huge) first layer, directly
        # into the resident f32 output block (no separate scratch accumulator).
        fc1_ref[...] += jnp.dot(x_ref[...], w1_ref[...],
                                preferred_element_type=jnp.float32)

        @pl.when(k == pl.num_programs(0) - 1)
        def _finish():
            fc = fc1_ref[...] + b1_ref[...]        # add bias once, at the end
            fc1_ref[...] = fc
            h = jnp.maximum(fc, 0.0)
            for li in range(1, num_hidden + 1):    # hidden layers 2..H, then head
                w_ref = in_refs[1 + 2 * li]
                b_ref = in_refs[2 + 2 * li]
                fc_i = jnp.dot(h.astype(w_ref.dtype), w_ref[...],
                               preferred_element_type=jnp.float32) + b_ref[...]
                out_refs[li][...] = fc_i.astype(out_refs[li].dtype)
                if li < num_hidden:
                    h = jnp.maximum(fc_i, 0.0)

    return kernel


# ---------------------------------------------------------------------------
# VMEM budgeting & K-tile selection
# ---------------------------------------------------------------------------
def _vmem_cap_bytes():
    """Per-generation scoped-VMEM cap with headroom (48 MiB max so v7x is safe)."""
    cap = 64 << 20
    try:
        cap = int(pltpu.get_tpu_info().vmem_capacity_bytes)
    except Exception:
        pass
    return min(48 << 20, (cap * 3) // 4)


def _estimate_vmem_bytes(B, k_tile, dims_pad):
    BF16, F32 = 2, 4
    h1 = dims_pad[0]
    total = 2 * B * k_tile * BF16                 # x K-tiles (double-buffered)
    total += 2 * k_tile * h1 * BF16               # w1 K-tiles (double-buffered)
    prev = h1
    for d in dims_pad[1:]:
        total += 2 * prev * d * BF16              # resident inner-layer weights
        prev = d
    for d in dims_pad:
        total += 2 * 8 * d * F32                  # biases (sublane-padded)
        total += 2 * max(B, 8) * d * F32          # output buffers
    return total


def _max_k_tile_for_budget(cap, dims_pad, b_est=8):
    """Largest 128-aligned K tile whose double-buffered stream fits ~half the cap."""
    h1 = dims_pad[0]
    fixed = 0
    prev = h1
    for d in dims_pad[1:]:
        fixed += 2 * prev * d * 2
        prev = d
    for d in dims_pad:
        fixed += 2 * 8 * d * 4 + 2 * b_est * d * 4
    per_k = 2 * 2 * (h1 + b_est)                  # bf16, double-buffered w1 + x per K
    avail = cap // 2 - fixed
    return max(128, (avail // per_k) // 128 * 128)


def _choose_k_tiling(K, max_tile):
    """128-aligned tile that (nearly) divides K -> minimal zero-padding waste."""
    K128 = _round_up(K, 128)
    max_tile = max(128, (min(max_tile, K128) // 128) * 128)
    num_tiles = _cdiv(K128, max_tile)
    k_tile = _round_up(_cdiv(K128, num_tiles), 128)
    return k_tile, k_tile * num_tiles, num_tiles


# ---------------------------------------------------------------------------
# One-time param preparation (pad/cast hoisted out of the forward path)
# ---------------------------------------------------------------------------
def prepare_simplenet_params(params, *, max_k_tile=32768):
    """params: list of (w [fan_in, fan_out], b [1, fan_out]).  Pads/casts once."""
    dims = [int(w.shape[1]) for (w, _) in params]          # [H1, ..., Hn, Dout]
    input_dim = int(params[0][0].shape[0])
    dims_pad = [_round_up(d, 128) for d in dims]

    cap = _vmem_cap_bytes()
    budget_tile = _max_k_tile_for_budget(cap, dims_pad)
    k_tile, k_pad, num_k_tiles = _choose_k_tiling(input_dim,
                                                  min(max_k_tile, budget_tile))

    in_dims = [input_dim] + dims[:-1]
    in_dims_pad = [k_pad] + dims_pad[:-1]
    padded = []
    for i, (w, b) in enumerate(params):
        wp = jnp.pad(w.astype(jnp.bfloat16),
                     ((0, in_dims_pad[i] - in_dims[i]), (0, dims_pad[i] - dims[i])))
        bp = jnp.pad(b.astype(jnp.float32).reshape(1, -1),
                     ((0, 0), (0, dims_pad[i] - dims[i])))
        padded.append((wp, bp))

    meta = dict(input_dim=input_dim, num_hidden=len(params) - 1,
                dims=dims, dims_pad=dims_pad,
                k_tile=k_tile, k_pad=k_pad, num_k_tiles=num_k_tiles,
                vmem_cap=cap)
    return meta, padded


# ---------------------------------------------------------------------------
# Forward: pad x (small), launch fused kernel, slice padding off, build features
# ---------------------------------------------------------------------------
def simplenet_forward(prepared, x):
    """Mirrors SimpleNet.forward: returns (out, features)."""
    meta, padded = prepared
    B, K = x.shape
    assert K == meta["input_dim"], "input_dim mismatch with prepared params"
    dims, dims_pad = meta["dims"], meta["dims_pad"]
    num_hidden = meta["num_hidden"]
    k_tile, k_pad, num_k = meta["k_tile"], meta["k_pad"], meta["num_k_tiles"]

    # Only the (small) activation is padded per call; batch stays at its true size.
    x_p = jnp.pad(x.astype(jnp.bfloat16), ((0, 0), (0, k_pad - K)))

    in_specs = [
        pl.BlockSpec((B, k_tile), lambda k: (0, k)),            # x K-tile
        pl.BlockSpec((k_tile, dims_pad[0]), lambda k: (k, 0)),  # w1 K-tile
        pl.BlockSpec((1, dims_pad[0]), lambda k: (0, 0)),       # b1 (resident)
    ]
    inputs = [x_p, padded[0][0], padded[0][1]]
    for i in range(1, num_hidden + 1):
        wp, bp = padded[i]
        in_specs.append(pl.BlockSpec(wp.shape, lambda k: (0, 0)))   # resident weight
        in_specs.append(pl.BlockSpec(bp.shape, lambda k: (0, 0)))   # resident bias
        inputs.extend([wp, bp])

    out_shape = tuple(jax.ShapeDtypeStruct((B, d), jnp.float32) for d in dims_pad)
    out_specs = tuple(pl.BlockSpec((B, d), lambda k: (0, 0)) for d in dims_pad)

    est = _estimate_vmem_bytes(B, k_tile, dims_pad)
    vmem_limit = int(min(meta["vmem_cap"], max(int(1.5 * est), 16 << 20)))

    outs = pl.pallas_call(
        _make_fused_mlp_kernel(num_hidden),
        out_shape=out_shape,
        grid_spec=pltpu.PrefetchScalarGridSpec(
            num_scalar_prefetch=0,
            grid=(num_k,),
            in_specs=in_specs,
            out_specs=out_specs,
        ),
        compiler_params=pltpu.CompilerParams(
            dimension_semantics=("arbitrary",),       # K is a reduction axis
            vmem_limit_bytes=vmem_limit,
        ),
    )(*inputs)

    # --- slice padding off, rebuild the features dict ------------------------
    features = {}
    for i in range(num_hidden):
        fc = outs[i][:, :dims[i]]
        features[f"fc{i + 1}"] = fc
        features[f"relu{i + 1}"] = jnp.maximum(fc, 0.0)   # exact, fused by XLA
    out = outs[-1][:, :dims[-1]]
    return out, features


# ---------------------------------------------------------------------------
# Params init (nn.Linear-style U(-1/sqrt(fan_in), +); weights stored [in, out])
# ---------------------------------------------------------------------------
def init_simplenet_params(key, input_dim, hidden_dims, output_dim):
    dims = [input_dim] + list(hidden_dims) + [output_dim]
    params = []
    for i in range(len(dims) - 1):
        fan_in, fan_out = dims[i], dims[i + 1]
        key, kw, kb = jax.random.split(key, 3)
        bound = 1.0 / jnp.sqrt(fan_in)
        w = jax.random.uniform(kw, (fan_in, fan_out), jnp.float32, -bound, bound)
        b = jax.random.uniform(kb, (1, fan_out), jnp.float32, -bound, bound)
        params.append((w, b))
    return params


# ---------------------------------------------------------------------------
# Plain-JAX reference (same bf16-in / f32-accumulate numerics as the kernel)
# ---------------------------------------------------------------------------
def simplenet_forward_ref(params, x):
    feats = {}
    num_hidden = len(params) - 1
    h = x.astype(jnp.bfloat16)
    for i in range(num_hidden):
        w, b = params[i]
        fc = jnp.dot(h, w.astype(jnp.bfloat16),
                     preferred_element_type=jnp.float32) + b
        feats[f"fc{i + 1}"] = fc
        relu = jnp.maximum(fc, 0.0)
        feats[f"relu{i + 1}"] = relu
        h = relu.astype(jnp.bfloat16)
    w_out, b_out = params[-1]
    out = jnp.dot(h, w_out.astype(jnp.bfloat16),
                  preferred_element_type=jnp.float32) + b_out
    return out, feats


if __name__ == "__main__":
    # Small shapes consistent with the module (original: 1 x 200000 -> [64, 32] -> 100).
    batch = 2
    input_dim = 300            # non-multiple of 128 -> exercises ragged-K padding
    hidden_dims = [64, 32]
    output_dim = 100

    key = jax.random.PRNGKey(0)
    key, kx = jax.random.split(key)
    x = jax.random.normal(kx, (batch, input_dim), jnp.float32)
    params = init_simplenet_params(key, input_dim, hidden_dims, output_dim)

    # max_k_tile=128 so the small demo exercises the multi-step K reduction
    # (the real 200k-input config uses the default 32768 -> ~7 grid steps).
    prepared = prepare_simplenet_params(params, max_k_tile=128)

    out, features = simplenet_forward(prepared, x)
    out = jax.block_until_ready(out)
    features = jax.tree_util.tree_map(jax.block_until_ready, features)

    out_ref, feats_ref = simplenet_forward_ref(params, x)
    assert out.shape == (batch, output_dim)
    assert jnp.allclose(out, out_ref, atol=1e-2, rtol=1e-2)
    for name in feats_ref:
        assert name in features
        assert features[name].shape == feats_ref[name].shape
        assert jnp.allclose(features[name], feats_ref[name], atol=1e-2, rtol=1e-2), name

    print("KERNEL_OK")
</pallas_src>

<mosaic_0001>
module attributes {stable_mosaic.version = 11 : i64} {
  func.func @kernel(%arg0: i32, %arg1: memref<2x128xbf16, #tpu.memory_space<vmem>>, %arg2: memref<128x128xbf16, #tpu.memory_space<vmem>>, %arg3: memref<1x128xf32, #tpu.memory_space<vmem>>, %arg4: memref<128x128xbf16, #tpu.memory_space<vmem>>, %arg5: memref<1x128xf32, #tpu.memory_space<vmem>>, %arg6: memref<128x128xbf16, #tpu.memory_space<vmem>>, %arg7: memref<1x128xf32, #tpu.memory_space<vmem>>, %arg8: memref<2x128xf32, #tpu.memory_space<vmem>>, %arg9: memref<2x128xf32, #tpu.memory_space<vmem>>, %arg10: memref<2x128xf32, #tpu.memory_space<vmem>>) attributes {dimension_semantics = [#tpu.dimension_semantics<arbitrary>], iteration_bounds = array<i64: 3>, scalar_prefetch = 0 : i64, scratch_operands = 0 : i64, tpu.core_type = #tpu.core_type<tc>, window_params = [{transform_indices = @transform_0, window_bounds = array<i64: 2, 128>}, {transform_indices = @transform_1, window_bounds = array<i64: 128, 128>}, {pipeline_mode = #tpu.pipeline_mode<synchronous>, transform_indices = @transform_2, window_bounds = array<i64: 1, 128>}, {pipeline_mode = #tpu.pipeline_mode<synchronous>, transform_indices = @transform_3, window_bounds = array<i64: 128, 128>}, {pipeline_mode = #tpu.pipeline_mode<synchronous>, transform_indices = @transform_4, window_bounds = array<i64: 1, 128>}, {pipeline_mode = #tpu.pipeline_mode<synchronous>, transform_indices = @transform_5, window_bounds = array<i64: 128, 128>}, {pipeline_mode = #tpu.pipeline_mode<synchronous>, transform_indices = @transform_6, window_bounds = array<i64: 1, 128>}, {pipeline_mode = #tpu.pipeline_mode<synchronous>, transform_indices = @transform_7, window_bounds = array<i64: 2, 128>}, {pipeline_mode = #tpu.pipeline_mode<synchronous>, transform_indices = @transform_8, window_bounds = array<i64: 2, 128>}, {pipeline_mode = #tpu.pipeline_mode<synchronous>, transform_indices = @transform_9, window_bounds = array<i64: 2, 128>}]} {
    %c0_i32 = arith.constant 0 : i32
    %0 = arith.cmpi eq, %arg0, %c0_i32 : i32
    %1 = arith.extui %0 : i1 to i32
    %c0_i32_0 = arith.constant 0 : i32
    %2 = arith.cmpi ne, %1, %c0_i32_0 : i32
    scf.if %2 {
      %cst_9 = arith.constant 0.000000e+00 : f32
      %12 = vector.broadcast %cst_9 : f32 to vector<2x128xf32>
      %c0_10 = arith.constant 0 : index
      %c0_11 = arith.constant 0 : index
      %13 = vector.load %arg8[%c0_10, %c0_11] : memref<2x128xf32, #tpu.memory_space<vmem>>, vector<2x128xf32>
      tpu.vector_store %arg8[%c0_10, %c0_11], %12 {strides = array<i32>} : memref<2x128xf32, #tpu.memory_space<vmem>>, vector<2x128xf32>,
    } else {
    }
    %c0 = arith.constant 0 : index
    %c0_1 = arith.constant 0 : index
    %3 = vector.load %arg8[%c0, %c0_1] : memref<2x128xf32, #tpu.memory_space<vmem>>, vector<2x128xf32>
    %c0_2 = arith.constant 0 : index
    %c0_3 = arith.constant 0 : index
    %4 = vector.load %arg1[%c0_2, %c0_3] : memref<2x128xbf16, #tpu.memory_space<vmem>>, vector<2x128xbf16>
    %c0_4 = arith.constant 0 : index
    %c0_5 = arith.constant 0 : index
    %5 = vector.load %arg2[%c0_4, %c0_5] : memref<128x128xbf16, #tpu.memory_space<vmem>>, vector<128x128xbf16>
    %cst = arith.constant dense<0.000000e+00> : vector<2x128xf32>
    %6 = tpu.matmul %4, %5, %cst {dimension_numbers = #tpu.dot_dimension_numbers<[1], [0], [0], [1], [0, 0, 1, 1], [], []>} : vector<2x128xbf16>, vector<128x128xbf16>, vector<2x128xf32> -> vector<2x128xf32>
    %7 = arith.addf %3, %6 : vector<2x128xf32>
    %c0_6 = arith.constant 0 : index
    %c0_7 = arith.constant 0 : index
    %8 = vector.load %arg8[%c0_6, %c0_7] : memref<2x128xf32, #tpu.memory_space<vmem>>, vector<2x128xf32>
    tpu.vector_store %arg8[%c0_6, %c0_7], %7 {strides = array<i32>} : memref<2x128xf32, #tpu.memory_space<vmem>>, vector<2x128xf32>,
    %c2_i32 = arith.constant 2 : i32
    %9 = arith.cmpi eq, %arg0, %c2_i32 : i32
    %10 = arith.extui %9 : i1 to i32
    %c0_i32_8 = arith.constant 0 : i32
    %11 = arith.cmpi ne, %10, %c0_i32_8 : i32
    scf.if %11 {
      %c0_9 = arith.constant 0 : index
      %c0_10 = arith.constant 0 : index
      %12 = vector.load %arg8[%c0_9, %c0_10] : memref<2x128xf32, #tpu.memory_space<vmem>>, vector<2x128xf32>
      %c0_11 = arith.constant 0 : index
      %c0_12 = arith.constant 0 : index
      %13 = vector.load %arg3[%c0_11, %c0_12] : memref<1x128xf32, #tpu.memory_space<vmem>>, vector<1x128xf32>
      %14 = vector.broadcast %13 : vector<1x128xf32> to vector<2x128xf32>
      %15 = arith.addf %12, %14 : vector<2x128xf32>
      %c0_13 = arith.constant 0 : index
      %c0_14 = arith.constant 0 : index
      %16 = vector.load %arg8[%c0_13, %c0_14] : memref<2x128xf32, #tpu.memory_space<vmem>>, vector<2x128xf32>
      tpu.vector_store %arg8[%c0_13, %c0_14], %15 {strides = array<i32>} : memref<2x128xf32, #tpu.memory_space<vmem>>, vector<2x128xf32>,
      %cst_15 = arith.constant 0.000000e+00 : f32
      %17 = vector.broadcast %cst_15 : f32 to vector<2x128xf32>
      %18 = arith.maximumf %15, %17 : vector<2x128xf32>
      %19 = arith.truncf %18 : vector<2x128xf32> to vector<2x128xbf16>
      %c0_16 = arith.constant 0 : index
      %c0_17 = arith.constant 0 : index
      %20 = vector.load %arg4[%c0_16, %c0_17] : memref<128x128xbf16, #tpu.memory_space<vmem>>, vector<128x128xbf16>
      %cst_18 = arith.constant dense<0.000000e+00> : vector<2x128xf32>
      %21 = tpu.matmul %19, %20, %cst_18 {dimension_numbers = #tpu.dot_dimension_numbers<[1], [0], [0], [1], [0, 0, 1, 1], [], []>} : vector<2x128xbf16>, vector<128x128xbf16>, vector<2x128xf32> -> vector<2x128xf32>
      %c0_19 = arith.constant 0 : index
      %c0_20 = arith.constant 0 : index
      %22 = vector.load %arg5[%c0_19, %c0_20] : memref<1x128xf32, #tpu.memory_space<vmem>>, vector<1x128xf32>
      %23 = vector.broadcast %22 : vector<1x128xf32> to vector<2x128xf32>
      %24 = arith.addf %21, %23 : vector<2x128xf32>
      %c0_21 = arith.constant 0 : index
      %c0_22 = arith.constant 0 : index
      %25 = vector.load %arg9[%c0_21, %c0_22] : memref<2x128xf32, #tpu.memory_space<vmem>>, vector<2x128xf32>
      tpu.vector_store %arg9[%c0_21, %c0_22], %24 {strides = array<i32>} : memref<2x128xf32, #tpu.memory_space<vmem>>, vector<2x128xf32>,
      %cst_23 = arith.constant 0.000000e+00 : f32
      %26 = vector.broadcast %cst_23 : f32 to vector<2x128xf32>
      %27 = arith.maximumf %24, %26 : vector<2x128xf32>
      %28 = arith.truncf %27 : vector<2x128xf32> to vector<2x128xbf16>
      %c0_24 = arith.constant 0 : index
      %c0_25 = arith.constant 0 : index
      %29 = vector.load %arg6[%c0_24, %c0_25] : memref<128x128xbf16, #tpu.memory_space<vmem>>, vector<128x128xbf16>
      %cst_26 = arith.constant dense<0.000000e+00> : vector<2x128xf32>
      %30 = tpu.matmul %28, %29, %cst_26 {dimension_numbers = #tpu.dot_dimension_numbers<[1], [0], [0], [1], [0, 0, 1, 1], [], []>} : vector<2x128xbf16>, vector<128x128xbf16>, vector<2x128xf32> -> vector<2x128xf32>
      %c0_27 = arith.constant 0 : index
      %c0_28 = arith.constant 0 : index
      %31 = vector.load %arg7[%c0_27, %c0_28] : memref<1x128xf32, #tpu.memory_space<vmem>>, vector<1x128xf32>
      %32 = vector.broadcast %31 : vector<1x128xf32> to vector<2x128xf32>
      %33 = arith.addf %30, %32 : vector<2x128xf32>
      %c0_29 = arith.constant 0 : index
      %c0_30 = arith.constant 0 : index
      %34 = vector.load %arg10[%c0_29, %c0_30] : memref<2x128xf32, #tpu.memory_space<vmem>>, vector<2x128xf32>
      tpu.vector_store %arg10[%c0_29, %c0_30], %33 {strides = array<i32>} : memref<2x128xf32, #tpu.memory_space<vmem>>, vector<2x128xf32>,
    } else {
    }
    return
  }
  func.func @transform_0(%arg0: i32) -> (i32, i32) {
    %c0_i32 = arith.constant 0 : i32
    %c0_i32_0 = arith.constant 0 : i32
    return %c0_i32, %arg0 : i32, i32
  }
  func.func @transform_1(%arg0: i32) -> (i32, i32) {
    %c0_i32 = arith.constant 0 : i32
    %c0_i32_0 = arith.constant 0 : i32
    return %arg0, %c0_i32 : i32, i32
  }
  func.func @transform_2(%arg0: i32) -> (i32, i32) {
    %c0_i32 = arith.constant 0 : i32
    %c0_i32_0 = arith.constant 0 : i32
    %c0_i32_1 = arith.constant 0 : i32
    return %c0_i32, %c0_i32_0 : i32, i32
  }
  func.func @transform_3(%arg0: i32) -> (i32, i32) {
    %c0_i32 = arith.constant 0 : i32
    %c0_i32_0 = arith.constant 0 : i32
    %c0_i32_1 = arith.constant 0 : i32
    return %c0_i32, %c0_i32_0 : i32, i32
  }
  func.func @transform_4(%arg0: i32) -> (i32, i32) {
    %c0_i32 = arith.constant 0 : i32
    %c0_i32_0 = arith.constant 0 : i32
    %c0_i32_1 = arith.constant 0 : i32
    return %c0_i32, %c0_i32_0 : i32, i32
  }
  func.func @transform_5(%arg0: i32) -> (i32, i32) {
    %c0_i32 = arith.constant 0 : i32
    %c0_i32_0 = arith.constant 0 : i32
    %c0_i32_1 = arith.constant 0 : i32
    return %c0_i32, %c0_i32_0 : i32, i32
  }
  func.func @transform_6(%arg0: i32) -> (i32, i32) {
    %c0_i32 = arith.constant 0 : i32
    %c0_i32_0 = arith.constant 0 : i32
    %c0_i32_1 = arith.constant 0 : i32
    return %c0_i32, %c0_i32_0 : i32, i32
  }
  func.func @transform_7(%arg0: i32) -> (i32, i32) {
    %c0_i32 = arith.constant 0 : i32
    %c0_i32_0 = arith.constant 0 : i32
    %c0_i32_1 = arith.constant 0 : i32
    return %c0_i32, %c0_i32_0 : i32, i32
  }
  func.func @transform_8(%arg0: i32) -> (i32, i32) {
    %c0_i32 = arith.constant 0 : i32
    %c0_i32_0 = arith.constant 0 : i32
    %c0_i32_1 = arith.constant 0 : i32
    return %c0_i32, %c0_i32_0 : i32, i32
  }
  func.func @transform_9(%arg0: i32) -> (i32, i32) {
    %c0_i32 = arith.constant 0 : i32
    %c0_i32_0 = arith.constant 0 : i32
    %c0_i32_1 = arith.constant 0 : i32
    return %c0_i32, %c0_i32_0 : i32, i32
  }
}

</mosaic_0001>

<llo_original>
// kernel: tpu_custom_call.1
$region0: #{tpu_custom_call.1}
  #allocation0 [shape = 'u32[]', space=smem, size = 0x4, offset = 0x4, fixed_abs, tag = 'smem constant byte address 0x4 - core index']
  #allocation1 [shape = 'u32[144,128]{1,0:T(1,128)}', space=vmem, size = 0x12000, scoped, tag = 'internal scratch']
  %s0 = inlined_call_operand.hbm [shape: bf16[2,384], index: 0, kind: input, shape index: {}]
  %s1 = inlined_call_operand.hbm [shape: bf16[384,128], index: 1, kind: input, shape index: {}]
  %s2 = inlined_call_operand.vmem [shape: f32[1,128], index: 2, kind: input, shape index: {}]
  %s3 = inlined_call_operand.hbm [shape: bf16[128,128], index: 3, kind: input, shape index: {}]
  %s4 = inlined_call_operand.vmem [shape: f32[1,128], index: 4, kind: input, shape index: {}]
  %s5 = inlined_call_operand.hbm [shape: bf16[128,128], index: 5, kind: input, shape index: {}]
  %s6 = inlined_call_operand.vmem [shape: f32[1,128], index: 6, kind: input, shape index: {}]
  %s7 = inlined_call_operand.hbm [shape: f32[2,128], index: 7, kind: output, shape index: {0}]
  %s8 = inlined_call_operand.hbm [shape: f32[2,128], index: 8, kind: output, shape index: {1}]
  %s9 = inlined_call_operand.hbm [shape: f32[2,128], index: 9, kind: output, shape index: {2}]
  %10 = xla_tuple %s7, %s8, %s9
  %s11 = sld [smem:[#allocation0]]
  $region101: #{tpu_custom_call.1} parent=0
    _
  %s13 = ssub.s32 1, %s11
  %s14 = scalar_select 0, %s13, %s11
  $region1: #{tpu_custom_call.1} parent=0
    #allocation2 [shape = 'u8[1024]{0}', space=vmem, size = 0x400, scoped, tag = 'input window, operand 0']
    #allocation3 [shape = 's32[2]{0}', space=sflag, size = 0x8, scoped, tag = 'scoped memory for tpu_custom_call.1']
    #allocation4 [shape = 's32[2]{0}', space=sflag, size = 0x8, scoped, tag = 'scoped memory for tpu_custom_call.1']
    #allocation5 [shape = 'u8[65536]{0}', space=vmem, size = 0x10000, scoped, tag = 'input window, operand 1']
    #allocation6 [shape = 's32[2]{0}', space=sflag, size = 0x8, scoped, tag = 'scoped memory for tpu_custom_call.1']
    #allocation7 [shape = 'u8[32768]{0}', space=vmem, size = 0x8000, scoped, tag = 'input window, operand 3, single buffered']
    #allocation8 [shape = 'u8[32768]{0}', space=vmem, size = 0x8000, scoped, tag = 'input window, operand 5, single buffered']
    #allocation9 [shape = 's32[1]{0}', space=sflag, size = 0x4, scoped, tag = 'scoped memory for tpu_custom_call.1']
    #allocation10 [shape = 'u8[1024]{0}', space=vmem, size = 0x400, scoped, tag = 'output window, operand 0, single buffered']
    #allocation11 [shape = 'u8[1024]{0}', space=vmem, size = 0x400, scoped, tag = 'output window, operand 1, single buffered']
    #allocation12 [shape = 's32[1]{0}', space=sflag, size = 0x4, scoped, tag = 'scoped memory for tpu_custom_call.1']
    #allocation13 [shape = 'u8[1024]{0}', space=vmem, size = 0x400, scoped, tag = 'output window, operand 2, single buffered']
    %15 = vsyncpa [#allocation3], 0
    %s16 = scalar_lea.sflag [#allocation3], 1
    %17 = vsyncpa %s16, 0
    %18 = vsyncpa [#allocation6], 0
    %s19 = scalar_lea.sflag [#allocation6], 1
    %20 = vsyncpa %s19, 0
    %21 = vsyncpa [#allocation9], 0
    %22 = vsyncpa [#allocation4], 0
    %23 = vsyncpa [#allocation12], 0
    loop: start=0, step=1, limit=5
    $region2: #{tpu_custom_call.1} parent=1 // loop_pre_header
      _
    $region3: #{tpu_custom_call.1} parent=1 // loop_header
      %s25 = sphi 0, %s29
      %p26 = scmp.ge.s32.totalorder %s25, 5
      %s35 = sphi 0, %s37
      %s38 = sphi 0, %s35
      %s39 = sphi 0, %s38
      %s55 = sphi 0, %s39
      %s61 = sphi 0, %s63
      %s64 = sphi 0, %s61
      %s65 = sphi 0, %s64
      %s81 = sphi 0, %s65
      %s85 = sphi 0, %s85
      %s87 = sphi 0, %s85
      %s88 = sphi 0, %s87
      %s102 = sphi 0, %s88
      %s106 = sphi 0, %s106
      %s108 = sphi 0, %s106
      %s109 = sphi 0, %s108
      %s123 = sphi 0, %s109
      %s127 = sphi 0, %s127
      %s129 = sphi 0, %s127
      %s130 = sphi 0, %s129
      %s144 = sphi 0, %s130
      %s148 = sphi 0, %s148
      %s150 = sphi 0, %s148
      %s151 = sphi 0, %s150
      %s165 = sphi 0, %s151
      %s169 = sphi 0, %s169
      %s171 = sphi 0, %s169
      %s172 = sphi 0, %s171
      %s186 = sphi 0, %s172
      %s190 = sphi 0, %s190
      %s192 = sphi 0, %s190
      %s193 = sphi 0, %s192
      %s207 = sphi 0, %s193
      %s211 = sphi 0, %s211
      %s213 = sphi 0, %s211
      %s214 = sphi 0, %s213
      %s228 = sphi 0, %s214
      %s232 = sphi 0, %s232
      %s234 = sphi 0, %s232
      %s235 = sphi 0, %s234
      %s249 = sphi 0, %s235
    $region4: #{tpu_custom_call.1} parent=1 // loop_header_branch
      %28 = sbr.rel (%p26) target = $region8
    $region5: #{tpu_custom_call.1} parent=1 // loop_body
      %s30 = ssub.s32 %s25, 1
      %s31 = ssub.s32 %s25, 2
      %s32 = sadd.s32 %s25, 1
      %s33 = ssub.s32 %s25, %s32
      %p34 = scmp.eq.s32.totalorder %s33, 0
      %s36 = sadd.s32 %s35, 1
      %s37 = scalar_select %p34, %s35, %s36
      %p40 = pneg %p34
      %p41 = scmp.eq.s32.totalorder %s25, 2
      %p42 = por %p40, %p41
      %p43 = scmp.ne.s32.totalorder %s35, %s38
      %p44 = scmp.eq.s32.totalorder %s25, 0
      %p45 = por %p43, %p44
      %p46 = scmp.ne.s32.totalorder %s35, %s38
      %p47 = scmp.eq.s32.totalorder %s30, 2
      %p48 = por %p46, %p47
      %p49 = scmp.ne.s32.totalorder %s38, %s39
      %p50 = scmp.eq.s32.totalorder %s30, 0
      %p51 = por %p49, %p50
      %p52 = scmp.ne.s32.totalorder %s38, %s39
      %p53 = scmp.eq.s32.totalorder %s31, 2
      %p54 = por %p52, %p53
      %p56 = scmp.ne.s32.totalorder %s39, %s55
      %p57 = scmp.eq.s32.totalorder %s31, 0
      %p58 = por %p56, %p57
      %s59 = ssub.s32 %s25, %s32
      %p60 = scmp.eq.s32.totalorder %s59, 0
      %s62 = sadd.s32 %s61, 1
      %s63 = scalar_select %p60, %s61, %s62
      %p66 = pneg %p60
      %p67 = scmp.eq.s32.totalorder %s25, 2
      %p68 = por %p66, %p67
      %p69 = scmp.ne.s32.totalorder %s61, %s64
      %p70 = scmp.eq.s32.totalorder %s25, 0
      %p71 = por %p69, %p70
      %p72 = scmp.ne.s32.totalorder %s61, %s64
      %p73 = scmp.eq.s32.totalorder %s30, 2
      %p74 = por %p72, %p73
      %p75 = scmp.ne.s32.totalorder %s64, %s65
      %p76 = scmp.eq.s32.totalorder %s30, 0
      %p77 = por %p75, %p76
      %p78 = scmp.ne.s32.totalorder %s64, %s65
      %p79 = scmp.eq.s32.totalorder %s31, 2
      %p80 = por %p78, %p79
      %p82 = scmp.ne.s32.totalorder %s65, %s81
      %p83 = scmp.eq.s32.totalorder %s31, 0
      %p84 = por %p82, %p83
      %s86 = sadd.s32 %s85, 1
      %p89 = scmp.eq.s32.totalorder %s25, 2
      %p90 = scmp.ne.s32.totalorder %s85, %s87
      %p91 = scmp.eq.s32.totalorder %s25, 0
      %p92 = por %p90, %p91
      %p93 = scmp.ne.s32.totalorder %s85, %s87
      %p94 = scmp.eq.s32.totalorder %s30, 2
      %p95 = por %p93, %p94
      %p96 = scmp.ne.s32.totalorder %s87, %s88
      %p97 = scmp.eq.s32.totalorder %s30, 0
      %p98 = por %p96, %p97
      %p99 = scmp.ne.s32.totalorder %s87, %s88
      %p100 = scmp.eq.s32.totalorder %s31, 2
      %p101 = por %p99, %p100
      %p103 = scmp.ne.s32.totalorder %s88, %s102
      %p104 = scmp.eq.s32.totalorder %s31, 0
      %p105 = por %p103, %p104
      %s107 = sadd.s32 %s106, 1
      %p110 = scmp.eq.s32.totalorder %s25, 2
      %p111 = scmp.ne.s32.totalorder %s106, %s108
      %p112 = scmp.eq.s32.totalorder %s25, 0
      %p113 = por %p111, %p112
      %p114 = scmp.ne.s32.totalorder %s106, %s108
      %p115 = scmp.eq.s32.totalorder %s30, 2
      %p116 = por %p114, %p115
      %p117 = scmp.ne.s32.totalorder %s108, %s109
      %p118 = scmp.eq.s32.totalorder %s30, 0
      %p119 = por %p117, %p118
      %p120 = scmp.ne.s32.totalorder %s108, %s109
      %p121 = scmp.eq.s32.totalorder %s31, 2
      %p122 = por %p120, %p121
      %p124 = scmp.ne.s32.totalorder %s109, %s123
      %p125 = scmp.eq.s32.totalorder %s31, 0
      %p126 = por %p124, %p125
      %s128 = sadd.s32 %s127, 1
      %p131 = scmp.eq.s32.totalorder %s25, 2
      %p132 = scmp.ne.s32.totalorder %s127, %s129
      %p133 = scmp.eq.s32.totalorder %s25, 0
      %p134 = por %p132, %p133
      %p135 = scmp.ne.s32.totalorder %s127, %s129
      %p136 = scmp.eq.s32.totalorder %s30, 2
      %p137 = por %p135, %p136
      %p138 = scmp.ne.s32.totalorder %s129, %s130
      %p139 = scmp.eq.s32.totalorder %s30, 0
      %p140 = por %p138, %p139
      %p141 = scmp.ne.s32.totalorder %s129, %s130
      %p142 = scmp.eq.s32.totalorder %s31, 2
      %p143 = por %p141, %p142
      %p145 = scmp.ne.s32.totalorder %s130, %s144
      %p146 = scmp.eq.s32.totalorder %s31, 0
      %p147 = por %p145, %p146
      %s149 = sadd.s32 %s148, 1
      %p152 = scmp.eq.s32.totalorder %s25, 2
      %p153 = scmp.ne.s32.totalorder %s148, %s150
      %p154 = scmp.eq.s32.totalorder %s25, 0
      %p155 = por %p153, %p154
      %p156 = scmp.ne.s32.totalorder %s148, %s150
      %p157 = scmp.eq.s32.totalorder %s30, 2
      %p158 = por %p156, %p157
      %p159 = scmp.ne.s32.totalorder %s150, %s151
      %p160 = scmp.eq.s32.totalorder %s30, 0
      %p161 = por %p159, %p160
      %p162 = scmp.ne.s32.totalorder %s150, %s151
      %p163 = scmp.eq.s32.totalorder %s31, 2
      %p164 = por %p162, %p163
      %p166 = scmp.ne.s32.totalorder %s151, %s165
      %p167 = scmp.eq.s32.totalorder %s31, 0
      %p168 = por %p166, %p167
      %s170 = sadd.s32 %s169, 1
      %p173 = scmp.eq.s32.totalorder %s25, 2
      %p174 = scmp.ne.s32.totalorder %s169, %s171
      %p175 = scmp.eq.s32.totalorder %s25, 0
      %p176 = por %p174, %p175
      %p177 = scmp.ne.s32.totalorder %s169, %s171
      %p178 = scmp.eq.s32.totalorder %s30, 2
      %p179 = por %p177, %p178
      %p180 = scmp.ne.s32.totalorder %s171, %s172
      %p181 = scmp.eq.s32.totalorder %s30, 0
      %p182 = por %p180, %p181
      %p183 = scmp.ne.s32.totalorder %s171, %s172
      %p184 = scmp.eq.s32.totalorder %s31, 2
      %p185 = por %p183, %p184
      %p187 = scmp.ne.s32.totalorder %s172, %s186
      %p188 = scmp.eq.s32.totalorder %s31, 0
      %p189 = por %p187, %p188
      %s191 = sadd.s32 %s190, 1
      %p194 = scmp.eq.s32.totalorder %s25, 2
      %p195 = scmp.ne.s32.totalorder %s190, %s192
      %p196 = scmp.eq.s32.totalorder %s25, 0
      %p197 = por %p195, %p196
      %p198 = scmp.ne.s32.totalorder %s190, %s192
      %p199 = scmp.eq.s32.totalorder %s30, 2
      %p200 = por %p198, %p199
      %p201 = scmp.ne.s32.totalorder %s192, %s193
      %p202 = scmp.eq.s32.totalorder %s30, 0
      %p203 = por %p201, %p202
      %p204 = scmp.ne.s32.totalorder %s192, %s193
      %p205 = scmp.eq.s32.totalorder %s31, 2
      %p206 = por %p204, %p205
      %p208 = scmp.ne.s32.totalorder %s193, %s207
      %p209 = scmp.eq.s32.totalorder %s31, 0
      %p210 = por %p208, %p209
      %s212 = sadd.s32 %s211, 1
      %p215 = scmp.eq.s32.totalorder %s25, 2
      %p216 = scmp.ne.s32.totalorder %s211, %s213
      %p217 = scmp.eq.s32.totalorder %s25, 0
      %p218 = por %p216, %p217
      %p219 = scmp.ne.s32.totalorder %s211, %s213
      %p220 = scmp.eq.s32.totalorder %s30, 2
      %p221 = por %p219, %p220
      %p222 = scmp.ne.s32.totalorder %s213, %s214
      %p223 = scmp.eq.s32.totalorder %s30, 0
      %p224 = por %p222, %p223
      %p225 = scmp.ne.s32.totalorder %s213, %s214
      %p226 = scmp.eq.s32.totalorder %s31, 2
      %p227 = por %p225, %p226
      %p229 = scmp.ne.s32.totalorder %s214, %s228
      %p230 = scmp.eq.s32.totalorder %s31, 0
      %p231 = por %p229, %p230
      %s233 = sadd.s32 %s232, 1
      %p236 = scmp.eq.s32.totalorder %s25, 2
      %p237 = scmp.ne.s32.totalorder %s232, %s234
      %p238 = scmp.eq.s32.totalorder %s25, 0
      %p239 = por %p237, %p238
      %p240 = scmp.ne.s32.totalorder %s232, %s234
      %p241 = scmp.eq.s32.totalorder %s30, 2
      %p242 = por %p240, %p241
      %p243 = scmp.ne.s32.totalorder %s234, %s235
      %p244 = scmp.eq.s32.totalorder %s30, 0
      %p245 = por %p243, %p244
      %p246 = scmp.ne.s32.totalorder %s234, %s235
      %p247 = scmp.eq.s32.totalorder %s31, 2
      %p248 = por %p246, %p247
      %p250 = scmp.ne.s32.totalorder %s235, %s249
      %p251 = scmp.eq.s32.totalorder %s31, 0
      %p252 = por %p250, %p251
      %p253 = scmp.le.s32.totalorder 1, %s25
      %p254 = scmp.lt.s32.totalorder %s25, 4
      %p255 = pnand %p253, %p254
      %p256 = pneg %p255
      // Predicated region
      $region9: #{tpu_custom_call.1} parent=5 // pred_check
        _
      $region10: #{tpu_custom_call.1} parent=5 // pred_check_branch
        %258 = sbr.rel (%p255) target = $region12
      $region11: #{tpu_custom_call.1} parent=5 // pred_region
        %s259 = ssub.s32 %s25, 1
        // Predicated region
        $region13: #{tpu_custom_call.1} parent=11 // pred_check
          %p260 = pneg %p98
        $region14: #{tpu_custom_call.1} parent=11 // pred_check_branch
          %262 = sbr.rel (%p260) target = $region16
        $region15: #{tpu_custom_call.1} parent=11 // pred_region
          _
        $region16: #{tpu_custom_call.1} parent=11 // pred_fallthru
          _
        // Predicated region
        $region17: #{tpu_custom_call.1} parent=11 // pred_check
          %p263 = pneg %p119
        $region18: #{tpu_custom_call.1} parent=11 // pred_check_branch
          %265 = sbr.rel (%p263) target = $region20
        $region19: #{tpu_custom_call.1} parent=11 // pred_region
          %s267 = ssub.s32 1024, 1024
          %268 = vsyncadd [#allocation6], %s267
          %s269 = sshll.u32 [#allocation7], 4
          %s270 = int_to_ptr.vmem [resolvable:$true] %s269
          %275 = dma.hbm_to_vmem [thread:$0]  %s3, 1024, %s270, [#allocation6], 64, 64, 4
        $region20: #{tpu_custom_call.1} parent=11 // pred_fallthru
          _
        // Predicated region
        $region21: #{tpu_custom_call.1} parent=11 // pred_check
          %p276 = pneg %p140
        $region22: #{tpu_custom_call.1} parent=11 // pred_check_branch
          %278 = sbr.rel (%p276) target = $region24
        $region23: #{tpu_custom_call.1} parent=11 // pred_region
          _
        $region24: #{tpu_custom_call.1} parent=11 // pred_fallthru
          _
        // Predicated region
        $region25: #{tpu_custom_call.1} parent=11 // pred_check
          %p279 = pneg %p161
        $region26: #{tpu_custom_call.1} parent=11 // pred_check_branch
          %281 = sbr.rel (%p279) target = $region28
        $region27: #{tpu_custom_call.1} parent=11 // pred_region
          %s283 = ssub.s32 1024, 1024
          %284 = vsyncadd [#allocation9], %s283
          %s285 = sshll.u32 [#allocation8], 4
          %s286 = int_to_ptr.vmem [resolvable:$true] %s285
          %291 = dma.hbm_to_vmem [thread:$0]  %s5, 1024, %s286, [#allocation9], 64, 64, 4
        $region28: #{tpu_custom_call.1} parent=11 // pred_fallthru
          _
        // Predicated region
        $region29: #{tpu_custom_call.1} parent=11 // pred_check
          %p292 = pneg %p182
        $region30: #{tpu_custom_call.1} parent=11 // pred_check_branch
          %294 = sbr.rel (%p292) target = $region32
        $region31: #{tpu_custom_call.1} parent=11 // pred_region
          _
        $region32: #{tpu_custom_call.1} parent=11 // pred_fallthru
          _
      $region12: #{tpu_custom_call.1} parent=5 // pred_fallthru
        _
      %p295 = scmp.lt.s32.totalorder %s25, 3
      // Predicated region
      $region33: #{tpu_custom_call.1} parent=5 // pred_check
        %p296 = pneg %p295
      $region34: #{tpu_custom_call.1} parent=5 // pred_check_branch
        %298 = sbr.rel (%p296) target = $region36
      $region35: #{tpu_custom_call.1} parent=5 // pred_region
        // Predicated region
        $region37: #{tpu_custom_call.1} parent=35 // pred_check
          %p299 = pneg %p45
        $region38: #{tpu_custom_call.1} parent=35 // pred_check_branch
          %301 = sbr.rel (%p299) target = $region40
        $region39: #{tpu_custom_call.1} parent=35 // pred_region
          %s302 = sand.u32 %s35, 1
          %s303 = scalar_lea.sflag [#allocation3], %s302
          %s304 = sand.u32 %s35, 1
          %s305 = scalar_lea.vmem [#allocation2], %s304
          %s307 = ssub.s32 16, 16
          %308 = vsyncadd %s303, %s307
          %s309 = smul.addr %s25, 16
          %s310 = scalar_lea.hbm %s0, %s309
          %s312 = sshll.u32 %s305, 4
          %s313 = int_to_ptr.vmem [resolvable:$true] %s312
          %315 = dma.hbm_to_vmem [thread:$0]  %s310, 16, %s313, %s303
        $region40: #{tpu_custom_call.1} parent=35 // pred_fallthru
          _
        // Predicated region
        $region41: #{tpu_custom_call.1} parent=35 // pred_check
          %p316 = pneg %p71
        $region42: #{tpu_custom_call.1} parent=35 // pred_check_branch
          %318 = sbr.rel (%p316) target = $region44
        $region43: #{tpu_custom_call.1} parent=35 // pred_region
          %s319 = sand.u32 %s25, 1
          %s320 = scalar_lea.sflag [#allocation6], %s319
          %s321 = sand.u32 %s61, 1
          %s322 = smul.addr %s321, 64
          %s323 = scalar_lea.vmem [#allocation5], %s322
          %s324 = smul.u32 16, %s25
          %s326 = ssub.s32 1024, 1024
          %327 = vsyncadd %s320, %s326
          %s328 = smul.addr %s324, 64
          %s329 = scalar_lea.hbm %s1, %s328
          %s330 = sshll.u32 %s323, 4
          %s331 = int_to_ptr.vmem [resolvable:$true] %s330
          %336 = dma.hbm_to_vmem [thread:$0]  %s329, 1024, %s331, %s320, 64, 64, 4
        $region44: #{tpu_custom_call.1} parent=35 // pred_fallthru
          _
      $region36: #{tpu_custom_call.1} parent=5 // pred_fallthru
        _
      %p337 = scmp.le.s32.totalorder 1, %s25
      %p338 = scmp.lt.s32.totalorder %s25, 4
      %p339 = pnand %p337, %p338
      %p340 = pneg %p339
      // Predicated region
      $region45: #{tpu_custom_call.1} parent=5 // pred_check
        _
      $region46: #{tpu_custom_call.1} parent=5 // pred_check_branch
        %342 = sbr.rel (%p339) target = $region48
      $region47: #{tpu_custom_call.1} parent=5 // pred_region
        %s343 = ssub.s32 %s25, 1
        %s344 = sand.u32 %s38, 1
        %s345 = scalar_lea.sflag [#allocation3], %s344
        %s346 = sand.u32 %s38, 1
        %s347 = scalar_lea.vmem [#allocation2], %s346
        // Predicated region
        $region49: #{tpu_custom_call.1} parent=47 // pred_check
          %p348 = pneg %p51
        $region50: #{tpu_custom_call.1} parent=47 // pred_check_branch
          %350 = sbr.rel (%p348) target = $region52
        $region51: #{tpu_custom_call.1} parent=47 // pred_region
          %351 = dma.done %s345, 16
        $region52: #{tpu_custom_call.1} parent=47 // pred_fallthru
          _
        %s352 = sand.u32 %s30, 1
        %s353 = scalar_lea.sflag [#allocation6], %s352
        %s354 = sand.u32 %s64, 1
        %s355 = smul.addr %s354, 64
        %s356 = scalar_lea.vmem [#allocation5], %s355
        // Predicated region
        $region53: #{tpu_custom_call.1} parent=47 // pred_check
          %p357 = pneg %p77
        $region54: #{tpu_custom_call.1} parent=47 // pred_check_branch
          %359 = sbr.rel (%p357) target = $region56
        $region55: #{tpu_custom_call.1} parent=47 // pred_region
          %360 = dma.done %s353, 1024
        $region56: #{tpu_custom_call.1} parent=47 // pred_fallthru
          _
        // Predicated region
        $region57: #{tpu_custom_call.1} parent=47 // pred_check
          %p361 = pneg %p119
        $region58: #{tpu_custom_call.1} parent=47 // pred_check_branch
          %363 = sbr.rel (%p361) target = $region60
        $region59: #{tpu_custom_call.1} parent=47 // pred_region
          %364 = dma.done [#allocation6], 1024
        $region60: #{tpu_custom_call.1} parent=47 // pred_fallthru
          _
        // Predicated region
        $region61: #{tpu_custom_call.1} parent=47 // pred_check
          %p365 = pneg %p161
        $region62: #{tpu_custom_call.1} parent=47 // pred_check_branch
          %367 = sbr.rel (%p365) target = $region64
        $region63: #{tpu_custom_call.1} parent=47 // pred_region
          %368 = dma.done [#allocation9], 1024
        $region64: #{tpu_custom_call.1} parent=47 // pred_fallthru
          _
        %s369 = sand.u32 %s38, 1
        %s370 = scalar_lea.sflag [#allocation3], %s369
        %s371 = sand.u32 %s38, 1
        %s372 = scalar_lea.vmem [#allocation2], %s371
        %p373 = pneg %p51
        %p374 = pneg %p48
        %s375 = sand.u32 %s30, 1
        %s376 = scalar_lea.sflag [#allocation6], %s375
        %s377 = sand.u32 %s64, 1
        %s378 = smul.addr %s377, 64
        %s379 = scalar_lea.vmem [#allocation5], %s378
        %p380 = pneg %p77
        %p381 = pneg %p74
        %p382 = pneg %p98
        %p383 = pneg %p95
        %p384 = pneg %p119
        %p385 = pneg %p116
        %p386 = pneg %p140
        %p387 = pneg %p137
        %p388 = pneg %p161
        %p389 = pneg %p158
        %p390 = pneg %p182
        %p391 = pneg %p179
        %p392 = pneg %p203
        %p393 = pneg %p200
        %p394 = pneg %p224
        %p395 = pneg %p221
        %p396 = pneg %p245
        %p397 = pneg %p242
        %s398 = smul.u32 16, %s30
        %p400 = scmp.eq.s32.totalorder %s30, 0
        // Predicated region
        $region65: #{tpu_custom_call.1} parent=47 // pred_check
          %p401 = pneg %p400
        $region66: #{tpu_custom_call.1} parent=47 // pred_check_branch
          %403 = sbr.rel (%p401) target = $region68
        $region67: #{tpu_custom_call.1} parent=47 // pred_region
          %404 = vst [vmem:[#allocation10] sm:$0x3] 0.0
        $region68: #{tpu_custom_call.1} parent=47 // pred_fallthru
          _
        %v405 = vld [vmem:[#allocation10] sm:$0x3]
        %v406 = vld [vmem:[%s347] sm:$0x1]
        %v407 = vld [vmem:[%s356] sm:$0xf]
        %v408 = vld [vmem:[%s356 + $0x4] sm:$0xf]
        %v409 = vld [vmem:[%s356 + $0x8] sm:$0xf]
        %v410 = vld [vmem:[%s356 + $0xc] sm:$0xf]
        %v411 = vld [vmem:[%s356 + $0x10] sm:$0xf]
        %v412 = vld [vmem:[%s356 + $0x14] sm:$0xf]
        %v413 = vld [vmem:[%s356 + $0x18] sm:$0xf]
        %v414 = vld [vmem:[%s356 + $0x1c] sm:$0xf]
        %v415 = vld [vmem:[%s356 + $0x20] sm:$0xf]
        %v416 = vld [vmem:[%s356 + $0x24] sm:$0xf]
        %v417 = vld [vmem:[%s356 + $0x28] sm:$0xf]
        %v418 = vld [vmem:[%s356 + $0x2c] sm:$0xf]
        %v419 = vld [vmem:[%s356 + $0x30] sm:$0xf]
        %v420 = vld [vmem:[%s356 + $0x34] sm:$0xf]
        %v421 = vld [vmem:[%s356 + $0x38] sm:$0xf]
        %v422 = vld [vmem:[%s356 + $0x3c] sm:$0xf]
        %v439 = vunpack.c.l.b16 %v407
        %v440 = vunpack.c.l.b16 %v408
        %v441 = vunpack.c.l.b16 %v409
        %v442 = vunpack.c.l.b16 %v410
        %v443 = vunpack.c.l.b16 %v411
        %v444 = vunpack.c.l.b16 %v412
        %v445 = vunpack.c.l.b16 %v413
        %v446 = vunpack.c.l.b16 %v414
        %v447 = vunpack.c.l.b16 %v415
        %v448 = vunpack.c.l.b16 %v416
        %v449 = vunpack.c.l.b16 %v417
        %v450 = vunpack.c.l.b16 %v418
        %v451 = vunpack.c.l.b16 %v419
        %v452 = vunpack.c.l.b16 %v420
        %v453 = vunpack.c.l.b16 %v421
        %v454 = vunpack.c.l.b16 %v422
        %v455 = vpack.c.b16 %v440, %v439
        %v456 = vpack.c.b16 %v442, %v441
        %v457 = vpack.c.b16 %v444, %v443
        %v458 = vpack.c.b16 %v446, %v445
        %v459 = vpack.c.b16 %v448, %v447
        %v460 = vpack.c.b16 %v450, %v449
        %v461 = vpack.c.b16 %v452, %v451
        %v462 = vpack.c.b16 %v454, %v453
        %471 = vmatprep.subr.bf16.mxu0 0
        %472 = vmatpush1.bf16.msra.mxu0 %v455
        %473 = vmatprep.subr.bf16.mxu0 0
        %474 = vmatpush1.bf16.msra.mxu0 %v456
        %475 = vmatprep.subr.bf16.mxu0 0
        %476 = vmatpush1.bf16.msra.mxu0 %v457
        %477 = vmatprep.subr.bf16.mxu0 0
        %478 = vmatpush1.bf16.msra.mxu0 %v458
        %479 = vmatprep.subr.bf16.mxu0 0
        %480 = vmatpush1.bf16.msra.mxu0 %v459
        %481 = vmatprep.subr.bf16.mxu0 0
        %482 = vmatpush1.bf16.msra.mxu0 %v460
        %483 = vmatprep.subr.bf16.mxu0 0
        %484 = vmatpush1.bf16.msra.mxu0 %v461
        %485 = vmatprep.subr.bf16.mxu0 0
        %486 = vmatpush1.bf16.msra.mxu0 %v462
        %487 = vmatprep.subr.bf16.mxu0 0
        %488 = vmatpush1.bf16.msra.mxu0 0
        %489 = vmatprep.subr.bf16.mxu0 0
        %490 = vmatpush1.bf16.msra.mxu0 0
        %491 = vmatprep.subr.bf16.mxu0 0
        %492 = vmatpush1.bf16.msra.mxu0 0
        %493 = vmatprep.subr.bf16.mxu0 0
        %494 = vmatpush1.bf16.msra.mxu0 0
        %495 = vmatprep.subr.bf16.mxu0 0
        %496 = vmatpush1.bf16.msra.mxu0 0
        %497 = vmatprep.subr.bf16.mxu0 0
        %498 = vmatpush1.bf16.msra.mxu0 0
        %499 = vmatprep.subr.bf16.mxu0 0
        %500 = vmatpush1.bf16.msra.mxu0 0
        %501 = vmatprep.subr.bf16.mxu0 0
        %502 = vmatpush1.bf16.msra.mxu0 0
        %503 = vmatprep.mubr.bf16.mxu0 0
        %504 = vmatmul.mubr.bf16.gmra.mrb[0].mxu0 %v406
        %v505 = vpop.f32.mrb[0].mxu0
        %v506 = vadd.f32 0.0, %v505
        %v507 = vpop.f32.mrb[0].mxu0
        %v508 = vpop.f32.mrb[0].mxu0
        %v509 = vpop.f32.mrb[0].mxu0
        %510 = vdwg.mxu0
        %v511 = vadd.f32 %v405, %v506
        %512 = vst [vmem:[#allocation10] sm:$0x3] %v511
        %p513 = scmp.eq.s32.totalorder %s30, 2
        // Predicated region
        $region69: #{tpu_custom_call.1} parent=47 // pred_check
          %p514 = pneg %p513
        $region70: #{tpu_custom_call.1} parent=47 // pred_check_branch
          %516 = sbr.rel (%p514) target = $region72
        $region71: #{tpu_custom_call.1} parent=47 // pred_region
          %v517 = vld [vmem:[#allocation10] sm:$0x3]
          %v518 = vld [vmem:[%s2] sm:$0x1]
          %v520 = vlaneseq
          %v521 = vshrl.u32 %v520, 7
          %v522 = vsub.s32 0, %v521
          %v523 = vrot.slane %v518, %v522
          %v525 = vadd.f32 %v517, %v523
          %526 = vst [vmem:[#allocation10] sm:$0x3] %v525
          %v527 = vmax.f32 %v525, 0.0
          %v528 = vpack.c.bf16 %v527, %v527
          %v529 = vld [vmem:[#allocation7] sm:$0xf]
          %v530 = vld [vmem:[#allocation7 + $0x4] sm:$0xf]
          %v531 = vld [vmem:[#allocation7 + $0x8] sm:$0xf]
          %v532 = vld [vmem:[#allocation7 + $0xc] sm:$0xf]
          %v533 = vld [vmem:[#allocation7 + $0x10] sm:$0xf]
          %v534 = vld [vmem:[#allocation7 + $0x14] sm:$0xf]
          %v535 = vld [vmem:[#allocation7 + $0x18] sm:$0xf]
          %v536 = vld [vmem:[#allocation7 + $0x1c] sm:$0xf]
          %v537 = vld [vmem:[#allocation7 + $0x20] sm:$0xf]
          %v538 = vld [vmem:[#allocation7 + $0x24] sm:$0xf]
          %v539 = vld [vmem:[#allocation7 + $0x28] sm:$0xf]
          %v540 = vld [vmem:[#allocation7 + $0x2c] sm:$0xf]
          %v541 = vld [vmem:[#allocation7 + $0x30] sm:$0xf]
          %v542 = vld [vmem:[#allocation7 + $0x34] sm:$0xf]
          %v543 = vld [vmem:[#allocation7 + $0x38] sm:$0xf]
          %v544 = vld [vmem:[#allocation7 + $0x3c] sm:$0xf]
          %v545 = vld [vmem:[%s4] sm:$0x1]
          %v547 = vlaneseq
          %v548 = vshrl.u32 %v547, 7
          %v549 = vsub.s32 0, %v548
          %v550 = vrot.slane %v545, %v549
          %v568 = vunpack.c.l.b16 %v529
          %v569 = vunpack.c.l.b16 %v530
          %v570 = vunpack.c.l.b16 %v531
          %v571 = vunpack.c.l.b16 %v532
          %v572 = vunpack.c.l.b16 %v533
          %v573 = vunpack.c.l.b16 %v534
          %v574 = vunpack.c.l.b16 %v535
          %v575 = vunpack.c.l.b16 %v536
          %v576 = vunpack.c.l.b16 %v537
          %v577 = vunpack.c.l.b16 %v538
          %v578 = vunpack.c.l.b16 %v539
          %v579 = vunpack.c.l.b16 %v540
          %v580 = vunpack.c.l.b16 %v541
          %v581 = vunpack.c.l.b16 %v542
          %v582 = vunpack.c.l.b16 %v543
          %v583 = vunpack.c.l.b16 %v544
          %v584 = vpack.c.b16 %v569, %v568
          %v585 = vpack.c.b16 %v571, %v570
          %v586 = vpack.c.b16 %v573, %v572
          %v587 = vpack.c.b16 %v575, %v574
          %v588 = vpack.c.b16 %v577, %v576
          %v589 = vpack.c.b16 %v579, %v578
          %v590 = vpack.c.b16 %v581, %v580
          %v591 = vpack.c.b16 %v583, %v582
          %600 = vmatprep.subr.bf16.mxu0 0
          %601 = vmatpush1.bf16.msra.mxu0 %v584
          %602 = vmatprep.subr.bf16.mxu0 0
          %603 = vmatpush1.bf16.msra.mxu0 %v585
          %604 = vmatprep.subr.bf16.mxu0 0
          %605 = vmatpush1.bf16.msra.mxu0 %v586
          %606 = vmatprep.subr.bf16.mxu0 0
          %607 = vmatpush1.bf16.msra.mxu0 %v587
          %608 = vmatprep.subr.bf16.mxu0 0
          %609 = vmatpush1.bf16.msra.mxu0 %v588
          %610 = vmatprep.subr.bf16.mxu0 0
          %611 = vmatpush1.bf16.msra.mxu0 %v589
          %612 = vmatprep.subr.bf16.mxu0 0
          %613 = vmatpush1.bf16.msra.mxu0 %v590
          %614 = vmatprep.subr.bf16.mxu0 0
          %615 = vmatpush1.bf16.msra.mxu0 %v591
          %616 = vmatprep.subr.bf16.mxu0 0
          %617 = vmatpush1.bf16.msra.mxu0 0
          %618 = vmatprep.subr.bf16.mxu0 0
          %619 = vmatpush1.bf16.msra.mxu0 0
          %620 = vmatprep.subr.bf16.mxu0 0
          %621 = vmatpush1.bf16.msra.mxu0 0
          %622 = vmatprep.subr.bf16.mxu0 0
          %623 = vmatpush1.bf16.msra.mxu0 0
          %624 = vmatprep.subr.bf16.mxu0 0
          %625 = vmatpush1.bf16.msra.mxu0 0
          %626 = vmatprep.subr.bf16.mxu0 0
          %627 = vmatpush1.bf16.msra.mxu0 0
          %628 = vmatprep.subr.bf16.mxu0 0
          %629 = vmatpush1.bf16.msra.mxu0 0
          %630 = vmatprep.subr.bf16.mxu0 0
          %631 = vmatpush1.bf16.msra.mxu0 0
          %632 = vmatprep.mubr.bf16.mxu0 0
          %633 = vmatmul.mubr.bf16.gmra.mrb[0].mxu0 %v528
          %v634 = vpop.f32.mrb[0].mxu0
          %v635 = vadd.f32 %v550, %v634
          %v636 = vpop.f32.mrb[0].mxu0
          %v637 = vpop.f32.mrb[0].mxu0
          %v638 = vpop.f32.mrb[0].mxu0
          %639 = vdwg.mxu0
          %640 = vst [vmem:[#allocation11] sm:$0x3] %v635
          %v641 = vmax.f32 %v635, 0.0
          %v642 = vpack.c.bf16 %v641, %v641
          %v643 = vld [vmem:[#allocation8] sm:$0xf]
          %v644 = vld [vmem:[#allocation8 + $0x4] sm:$0xf]
          %v645 = vld [vmem:[#allocation8 + $0x8] sm:$0xf]
          %v646 = vld [vmem:[#allocation8 + $0xc] sm:$0xf]
          %v647 = vld [vmem:[#allocation8 + $0x10] sm:$0xf]
          %v648 = vld [vmem:[#allocation8 + $0x14] sm:$0xf]
          %v649 = vld [vmem:[#allocation8 + $0x18] sm:$0xf]
          %v650 = vld [vmem:[#allocation8 + $0x1c] sm:$0xf]
          %v651 = vld [vmem:[#allocation8 + $0x20] sm:$0xf]
          %v652 = vld [vmem:[#allocation8 + $0x24] sm:$0xf]
          %v653 = vld [vmem:[#allocation8 + $0x28] sm:$0xf]
          %v654 = vld [vmem:[#allocation8 + $0x2c] sm:$0xf]
          %v655 = vld [vmem:[#allocation8 + $0x30] sm:$0xf]
          %v656 = vld [vmem:[#allocation8 + $0x34] sm:$0xf]
          %v657 = vld [vmem:[#allocation8 + $0x38] sm:$0xf]
          %v658 = vld [vmem:[#allocation8 + $0x3c] sm:$0xf]
          %v659 = vld [vmem:[%s6] sm:$0x1]
          %v661 = vlaneseq
          %v662 = vshrl.u32 %v661, 7
          %v663 = vsub.s32 0, %v662
          %v664 = vrot.slane %v659, %v663
          %v682 = vunpack.c.l.b16 %v643
          %v683 = vunpack.c.l.b16 %v644
          %v684 = vunpack.c.l.b16 %v645
          %v685 = vunpack.c.l.b16 %v646
          %v686 = vunpack.c.l.b16 %v647
          %v687 = vunpack.c.l.b16 %v648
          %v688 = vunpack.c.l.b16 %v649
          %v689 = vunpack.c.l.b16 %v650
          %v690 = vunpack.c.l.b16 %v651
          %v691 = vunpack.c.l.b16 %v652
          %v692 = vunpack.c.l.b16 %v653
          %v693 = vunpack.c.l.b16 %v654
          %v694 = vunpack.c.l.b16 %v655
          %v695 = vunpack.c.l.b16 %v656
          %v696 = vunpack.c.l.b16 %v657
          %v697 = vunpack.c.l.b16 %v658
          %v698 = vpack.c.b16 %v683, %v682
          %v699 = vpack.c.b16 %v685, %v684
          %v700 = vpack.c.b16 %v687, %v686
          %v701 = vpack.c.b16 %v689, %v688
          %v702 = vpack.c.b16 %v691, %v690
          %v703 = vpack.c.b16 %v693, %v692
          %v704 = vpack.c.b16 %v695, %v694
          %v705 = vpack.c.b16 %v697, %v696
          %714 = vmatprep.subr.bf16.mxu0 0
          %715 = vmatpush1.bf16.msra.mxu0 %v698
          %716 = vmatprep.subr.bf16.mxu0 0
          %717 = vmatpush1.bf16.msra.mxu0 %v699
          %718 = vmatprep.subr.bf16.mxu0 0
          %719 = vmatpush1.bf16.msra.mxu0 %v700
          %720 = vmatprep.subr.bf16.mxu0 0
          %721 = vmatpush1.bf16.msra.mxu0 %v701
          %722 = vmatprep.subr.bf16.mxu0 0
          %723 = vmatpush1.bf16.msra.mxu0 %v702
          %724 = vmatprep.subr.bf16.mxu0 0
          %725 = vmatpush1.bf16.msra.mxu0 %v703
          %726 = vmatprep.subr.bf16.mxu0 0
          %727 = vmatpush1.bf16.msra.mxu0 %v704
          %728 = vmatprep.subr.bf16.mxu0 0
          %729 = vmatpush1.bf16.msra.mxu0 %v705
          %730 = vmatprep.subr.bf16.mxu0 0
          %731 = vmatpush1.bf16.msra.mxu0 0
          %732 = vmatprep.subr.bf16.mxu0 0
          %733 = vmatpush1.bf16.msra.mxu0 0
          %734 = vmatprep.subr.bf16.mxu0 0
          %735 = vmatpush1.bf16.msra.mxu0 0
          %736 = vmatprep.subr.bf16.mxu0 0
          %737 = vmatpush1.bf16.msra.mxu0 0
          %738 = vmatprep.subr.bf16.mxu0 0
          %739 = vmatpush1.bf16.msra.mxu0 0
          %740 = vmatprep.subr.bf16.mxu0 0
          %741 = vmatpush1.bf16.msra.mxu0 0
          %742 = vmatprep.subr.bf16.mxu0 0
          %743 = vmatpush1.bf16.msra.mxu0 0
          %744 = vmatprep.subr.bf16.mxu0 0
          %745 = vmatpush1.bf16.msra.mxu0 0
          %746 = vmatprep.mubr.bf16.mxu0 0
          %747 = vmatmul.mubr.bf16.gmra.mrb[0].mxu0 %v642
          %v748 = vpop.f32.mrb[0].mxu0
          %v749 = vadd.f32 %v664, %v748
          %v750 = vpop.f32.mrb[0].mxu0
          %v751 = vpop.f32.mrb[0].mxu0
          %v752 = vpop.f32.mrb[0].mxu0
          %753 = vdwg.mxu0
          %754 = vst [vmem:[#allocation13] sm:$0x3] %v749
        $region72: #{tpu_custom_call.1} parent=47 // pred_fallthru
          _
        // Predicated region
        $region73: #{tpu_custom_call.1} parent=47 // pred_check
          %p755 = pneg %p200
        $region74: #{tpu_custom_call.1} parent=47 // pred_check_branch
          %757 = sbr.rel (%p755) target = $region76
        $region75: #{tpu_custom_call.1} parent=47 // pred_region
          %s759 = ssub.s32 32, 32
          %760 = vsyncadd [#allocation4], %s759
          %s762 = sshll.u32 [#allocation10], 4
          %s763 = int_to_ptr.vmem [resolvable:$true] %s762
          %765 = dma.vmem_to_hbm [thread:$0]  %s763, 32, %s7, [#allocation4]
        $region76: #{tpu_custom_call.1} parent=47 // pred_fallthru
          _
        // Predicated region
        $region77: #{tpu_custom_call.1} parent=47 // pred_check
          %p766 = pneg %p221
        $region78: #{tpu_custom_call.1} parent=47 // pred_check_branch
          %768 = sbr.rel (%p766) target = $region80
        $region79: #{tpu_custom_call.1} parent=47 // pred_region
          %s770 = ssub.s32 32, 32
          %771 = vsyncadd [#allocation12], %s770
          %s773 = sshll.u32 [#allocation11], 4
          %s774 = int_to_ptr.vmem [resolvable:$true] %s773
          %776 = dma.vmem_to_hbm [thread:$0]  %s774, 32, %s8, [#allocation12]
        $region80: #{tpu_custom_call.1} parent=47 // pred_fallthru
          _
        // Predicated region
        $region81: #{tpu_custom_call.1} parent=47 // pred_check
          %p777 = pneg %p242
        $region82: #{tpu_custom_call.1} parent=47 // pred_check_branch
          %779 = sbr.rel (%p777) target = $region84
        $region83: #{tpu_custom_call.1} parent=47 // pred_region
          %s781 = ssub.s32 32, 32
          %782 = vsyncadd [#allocation12], %s781
          %s784 = sshll.u32 [#allocation13], 4
          %s785 = int_to_ptr.vmem [resolvable:$true] %s784
          %787 = dma.vmem_to_hbm [thread:$0]  %s785, 32, %s9, [#allocation12]
        $region84: #{tpu_custom_call.1} parent=47 // pred_fallthru
          _
        // Predicated region
        $region85: #{tpu_custom_call.1} parent=47 // pred_check
          %p788 = pneg %p200
        $region86: #{tpu_custom_call.1} parent=47 // pred_check_branch
          %790 = sbr.rel (%p788) target = $region88
        $region87: #{tpu_custom_call.1} parent=47 // pred_region
          %791 = dma.done [#allocation4], 32
        $region88: #{tpu_custom_call.1} parent=47 // pred_fallthru
          _
        // Predicated region
        $region89: #{tpu_custom_call.1} parent=47 // pred_check
          %p792 = pneg %p221
        $region90: #{tpu_custom_call.1} parent=47 // pred_check_branch
          %794 = sbr.rel (%p792) target = $region92
        $region91: #{tpu_custom_call.1} parent=47 // pred_region
          %795 = dma.done [#allocation12], 32
        $region92: #{tpu_custom_call.1} parent=47 // pred_fallthru
          _
        // Predicated region
        $region93: #{tpu_custom_call.1} parent=47 // pred_check
          %p796 = pneg %p242
        $region94: #{tpu_custom_call.1} parent=47 // pred_check_branch
          %798 = sbr.rel (%p796) target = $region96
        $region95: #{tpu_custom_call.1} parent=47 // pred_region
          %799 = dma.done [#allocation12], 32
        $region96: #{tpu_custom_call.1} parent=47 // pred_fallthru
          _
      $region48: #{tpu_custom_call.1} parent=5 // pred_fallthru
        _
      %p800 = scmp.le.s32.totalorder 2, %s25
      // Predicated region
      $region97: #{tpu_custom_call.1} parent=5 // pred_check
        %p801 = pneg %p800
      $region98: #{tpu_custom_call.1} parent=5 // pred_check_branch
        %803 = sbr.rel (%p801) target = $region100
      $region99: #{tpu_custom_call.1} parent=5 // pred_region
        %s804 = ssub.s32 %s25, 2
      $region100: #{tpu_custom_call.1} parent=5 // pred_fallthru
        _
    $region6: #{tpu_custom_call.1} parent=1 // loop_footer
      %s29 = sadd.s32 1, %s25
    $region7: #{tpu_custom_call.1} parent=1 // loop_footer_branch
      %24 = sbr.rel target = $region3
    $region8: #{tpu_custom_call.1} parent=1 // loop_exit
      _
    %805 = vsyncpa [#allocation3], 1
    %s806 = scalar_lea.sflag [#allocation3], 1
    %807 = vsyncpa %s806, 1
    %808 = vsyncpa [#allocation6], 1
    %s809 = scalar_lea.sflag [#allocation6], 1
    %810 = vsyncpa %s809, 1
    %811 = vsyncpa [#allocation9], 1
    %812 = vsyncpa [#allocation4], 1
    %s813 = scalar_lea.sflag [#allocation4], 1
    %814 = vsyncpa %s813, 1
    %815 = vsyncpa [#allocation12], 1

</llo_original>
